<compile_context>
chip_gen: v7x
topology: tpu7x:2x2x1
jax: 0.10.0
libtpu: 0.0.40
codegen_flags: <defaults>
</compile_context>

<pallas_src>
import jax
import jax.numpy as jnp
from jax.experimental import pallas as pl
from jax.experimental.pallas import tpu as pltpu

KERNEL_SIZE = 25  # moving-average window of series_decomp
LANE = 128


def _moving_avg_matrix(seq_len: int, kernel_size: int) -> jnp.ndarray:
    """A[t, j] such that trend = A @ x reproduces series_decomp's replicate-padded
    AvgPool1d(kernel_size, stride=1) along the time axis."""
    pad = (kernel_size - 1) // 2
    t_idx = jnp.arange(seq_len)
    k_idx = jnp.arange(kernel_size)
    # padded index t + k maps to clamped original index (t + k - pad)
    src = jnp.clip(t_idx[:, None] + k_idx[None, :] - pad, 0, seq_len - 1)  # [L, K]
    A = jnp.zeros((seq_len, seq_len), jnp.float32)
    A = A.at[jnp.broadcast_to(t_idx[:, None], src.shape), src].add(1.0 / kernel_size)
    return A


def _dlinear_kernel(x_ref, w_ref, cm_ref, cs_ref, o_ref):
    # x_ref : [L, Nt] raw (un-normalized) slab tile, time on sublanes, series on lanes
    # w_ref : [P, L]  folded weight (whole array, VMEM-resident)
    # cm_ref: [P, 1]  (1 - rowsum(W_comb))   -> multiplies per-column mean
    # cs_ref: [P, 1]  (bs + bt)              -> multiplies per-column stdev
    x = x_ref[...].astype(jnp.float32)

    # Single-pass per-column moments over time (XLU sublane reduce on [1, Nt] rows).
    mean = jnp.mean(x, axis=0, keepdims=True)           # [1, Nt]
    ex2 = jnp.mean(x * x, axis=0, keepdims=True)        # [1, Nt]
    var = jnp.maximum(ex2 - mean * mean, 0.0)
    stdev = jnp.sqrt(var + 1e-5)                        # [1, Nt]  (unbiased=False)

    # MXU matmul on the raw tile; independent of the reductions above so it can
    # be issued immediately.
    out = jnp.dot(w_ref[...], x, preferred_element_type=jnp.float32)  # [P, Nt]

    # Folded normalize + de-normalize as two rank-1 affine corrections.
    out = out + cm_ref[...] * mean + cs_ref[...] * stdev

    o_ref[...] = out.astype(o_ref.dtype)


def _num_tensorcores_per_device() -> int:
    try:
        kind = jax.devices()[0].device_kind.lower()
    except Exception:  # pragma: no cover - defensive; default to single TC
        return 1
    # v4 / v5p are megacore; v7x has 2 TensorCores per device.
    return 2 if ("v4" in kind or "v5p" in kind or "v7" in kind) else 1


def _pick_tile(n_pad: int, L: int, P: int, n_cores: int) -> int:
    # Double-buffered input+output tiles: 2 * tile * (L + P) * 4 B <= ~8 MiB.
    budget = 8 * 1024 * 1024
    max_tile = max(LANE, min(2048, budget // (8 * (L + P))))
    max_tile = (max_tile // LANE) * LANE
    # Guarantee >= n_cores grid steps on multi-TC parts so "parallel" can shard.
    if n_cores > 1 and n_pad >= n_cores * LANE:
        max_tile = min(max_tile, (n_pad // n_cores) // LANE * LANE)
    max_tile = max(LANE, max_tile)
    tile = LANE
    for cand in range(max_tile, LANE - 1, -LANE):
        if n_pad % cand == 0:
            tile = cand
            break
    return tile


@jax.jit
def dlinear_forward(x_enc, Ws, bs, Wt, bt):
    """x_enc: [B, L, C] -> dec_out: [B, P, C] (use_norm=True, shared Linears)."""
    B, L, C = x_enc.shape
    P = Ws.shape[0]

    # Host-side (f32) folding: moving average + seasonal/trend Linears + norm fold.
    A = _moving_avg_matrix(L, KERNEL_SIZE)                                # [L, L]
    Ws32 = Ws.astype(jnp.float32)
    Wt32 = Wt.astype(jnp.float32)
    W_comb = Ws32 + jnp.dot(Wt32 - Ws32, A)                               # [P, L]
    b_comb = bs.astype(jnp.float32) + bt.astype(jnp.float32)              # [P]
    c_mean = (1.0 - jnp.sum(W_comb, axis=1)).reshape(P, 1)                # [P, 1]
    c_std = b_comb.reshape(P, 1)                                          # [P, 1]

    # Lane-dense slab [L, B*C]; under jit the transpose/reshape/pad fuse into one pass.
    N = B * C
    x2 = jnp.transpose(x_enc, (1, 0, 2)).reshape(L, N)
    N_pad = ((N + LANE - 1) // LANE) * LANE
    if N_pad != N:
        x2 = jnp.pad(x2, ((0, 0), (0, N_pad - N)))  # zero cols: finite, discarded later

    n_cores = _num_tensorcores_per_device()
    tile = _pick_tile(N_pad, L, P, n_cores)
    grid = (N_pad // tile,)

    itemsize = jnp.dtype(x2.dtype).itemsize
    cost = pl.CostEstimate(
        flops=2 * P * L * N_pad,
        transcendentals=0,
        bytes_accessed=L * N_pad * itemsize + P * N_pad * 4 + (P * L + 2 * P) * 4,
    )

    out2 = pl.pallas_call(
        _dlinear_kernel,
        out_shape=jax.ShapeDtypeStruct((P, N_pad), jnp.float32),
        grid_spec=pltpu.PrefetchScalarGridSpec(
            num_scalar_prefetch=0,
            grid=grid,
            in_specs=[
                pl.BlockSpec((L, tile), lambda n: (0, n)),               # input slab tile
                pl.BlockSpec(memory_space=pltpu.MemorySpace.VMEM),       # W_comb (resident)
                pl.BlockSpec(memory_space=pltpu.MemorySpace.VMEM),       # c_mean (resident)
                pl.BlockSpec(memory_space=pltpu.MemorySpace.VMEM),       # c_std  (resident)
            ],
            out_specs=pl.BlockSpec((P, tile), lambda n: (0, n)),
        ),
        compiler_params=pltpu.CompilerParams(
            dimension_semantics=("parallel",)),
        cost_estimate=cost,
    )(x2, W_comb, c_mean, c_std)

    # Back to [B, P, C] (fused with the kernel's consumers under jit).
    dec_out = out2[:, :N].reshape(P, B, C).transpose(1, 0, 2)
    return dec_out


def dlinear_reference(x_enc, Ws, bs, Wt, bt):
    """Pure-JAX replica of the PyTorch forward (use_norm=True, individual=False)."""
    B, L, C = x_enc.shape
    means = x_enc.mean(axis=1, keepdims=True)
    xc = x_enc - means
    stdev = jnp.sqrt(jnp.var(xc, axis=1, keepdims=True) + 1e-5)
    xn = xc / stdev
    pad = (KERNEL_SIZE - 1) // 2
    front = jnp.repeat(xn[:, :1, :], pad, axis=1)
    end = jnp.repeat(xn[:, -1:, :], pad, axis=1)
    padded = jnp.concatenate([front, xn, end], axis=1)
    trend = jnp.stack(
        [padded[:, t:t + KERNEL_SIZE, :].mean(axis=1) for t in range(L)], axis=1)
    seasonal = xn - trend
    s_out = jnp.einsum('blc,pl->bpc', seasonal, Ws) + bs[None, :, None]
    t_out = jnp.einsum('blc,pl->bpc', trend, Wt) + bt[None, :, None]
    dec = s_out + t_out
    dec = dec * stdev + means
    return dec


if __name__ == "__main__":
    B, L, P, C = 2, 32, 16, 8   # batch, seq_len, pred_len, enc_in

    key = jax.random.PRNGKey(0)
    k1, k2, k3, k4, k5 = jax.random.split(key, 5)

    x_enc = jax.random.normal(k1, (B, L, C), dtype=jnp.float32)
    # x_mark_enc / x_dec / x_mark_dec are unused by the DLinear forward.

    # Deterministic "nn.Linear"-style parameters (uniform in +/- 1/sqrt(L)).
    bound = 1.0 / (L ** 0.5)
    Ws = jax.random.uniform(k2, (P, L), jnp.float32, -bound, bound)
    bs = jax.random.uniform(k3, (P,), jnp.float32, -bound, bound)
    Wt = jax.random.uniform(k4, (P, L), jnp.float32, -bound, bound)
    bt = jax.random.uniform(k5, (P,), jnp.float32, -bound, bound)

    dec_out = dlinear_forward(x_enc, Ws, bs, Wt, bt)
    dec_out = jax.block_until_ready(dec_out)

    ref = dlinear_reference(x_enc, Ws, bs, Wt, bt)
    assert dec_out.shape == (B, P, C)
    assert jnp.allclose(dec_out, ref, rtol=1e-4, atol=1e-4), (
        float(jnp.max(jnp.abs(dec_out - ref))))

    print("KERNEL_OK")
</pallas_src>

<mosaic_0001>
module attributes {stable_mosaic.version = 11 : i64} {
  func.func private @main(%arg0: i32) attributes {dimension_semantics = [#tpu.dimension_semantics<core_parallel>], iteration_bounds = array<i64: 2>, tpu.core_type = #tpu.core_type<sc_scalar_subcore>, window_params = []} {
    return
  }
}

module attributes {stable_mosaic.version = 11 : i64} {
  func.func private @main(%arg0: i32) attributes {dimension_semantics = [#tpu.dimension_semantics<core_parallel>], iteration_bounds = array<i64: 2>, tpu.core_type = #tpu.core_type<sc_scalar_subcore>, window_params = []} {
    return
  }
}

module attributes {stable_mosaic.version = 11 : i64} {
  func.func @_dlinear_kernel(%arg0: i32, %arg1: memref<32x128xf32, #tpu.memory_space<vmem>>, %arg2: memref<16x32xf32, #tpu.memory_space<vmem>>, %arg3: memref<16x1xf32, #tpu.memory_space<vmem>>, %arg4: memref<16x1xf32, #tpu.memory_space<vmem>>, %arg5: memref<16x128xf32, #tpu.memory_space<vmem>>) attributes {dimension_semantics = [#tpu.dimension_semantics<parallel>], iteration_bounds = array<i64: 1>, scalar_prefetch = 0 : i64, scratch_operands = 0 : i64, tpu.core_type = #tpu.core_type<tc>, window_params = [{transform_indices = @transform_0, window_bounds = array<i64: 32, 128>}, {pipeline_mode = #tpu.pipeline_mode<synchronous>, transform_indices = @transform_1, window_bounds = array<i64: 16, 32>}, {pipeline_mode = #tpu.pipeline_mode<synchronous>, transform_indices = @transform_2, window_bounds = array<i64: 16, 1>}, {pipeline_mode = #tpu.pipeline_mode<synchronous>, transform_indices = @transform_3, window_bounds = array<i64: 16, 1>}, {transform_indices = @transform_4, window_bounds = array<i64: 16, 128>}]} {
    %c0 = arith.constant 0 : index
    %c0_0 = arith.constant 0 : index
    %0 = vector.load %arg1[%c0, %c0_0] : memref<32x128xf32, #tpu.memory_space<vmem>>, vector<32x128xf32>
    %cst = arith.constant dense<0.000000e+00> : vector<128xf32>
    %1 = vector.multi_reduction <add>, %0, %cst [0] : vector<32x128xf32> to vector<128xf32>
    %2 = vector.shape_cast %1 : vector<128xf32> to vector<1x128xf32>
    %cst_1 = arith.constant 3.200000e+01 : f32
    %3 = vector.broadcast %cst_1 : f32 to vector<1x128xf32>
    %4 = arith.divf %2, %3 : vector<1x128xf32>
    %5 = arith.mulf %0, %0 : vector<32x128xf32>
    %cst_2 = arith.constant dense<0.000000e+00> : vector<128xf32>
    %6 = vector.multi_reduction <add>, %5, %cst_2 [0] : vector<32x128xf32> to vector<128xf32>
    %7 = vector.shape_cast %6 : vector<128xf32> to vector<1x128xf32>
    %cst_3 = arith.constant 3.200000e+01 : f32
    %8 = vector.broadcast %cst_3 : f32 to vector<1x128xf32>
    %9 = arith.divf %7, %8 : vector<1x128xf32>
    %10 = arith.mulf %4, %4 : vector<1x128xf32>
    %11 = arith.subf %9, %10 : vector<1x128xf32>
    %cst_4 = arith.constant 0.000000e+00 : f32
    %12 = vector.broadcast %cst_4 : f32 to vector<1x128xf32>
    %13 = arith.maximumf %11, %12 : vector<1x128xf32>
    %cst_5 = arith.constant 9.99999974E-6 : f32
    %14 = vector.broadcast %cst_5 : f32 to vector<1x128xf32>
    %15 = arith.addf %13, %14 : vector<1x128xf32>
    %16 = math.sqrt %15 : vector<1x128xf32>
    %c0_6 = arith.constant 0 : index
    %c0_7 = arith.constant 0 : index
    %17 = vector.load %arg2[%c0_6, %c0_7] : memref<16x32xf32, #tpu.memory_space<vmem>>, vector<16x32xf32>
    %cst_8 = arith.constant dense<0.000000e+00> : vector<16x128xf32>
    %18 = tpu.matmul %17, %0, %cst_8 {dimension_numbers = #tpu.dot_dimension_numbers<[1], [0], [0], [1], [0, 0, 1, 1], [], []>} : vector<16x32xf32>, vector<32x128xf32>, vector<16x128xf32> -> vector<16x128xf32>
    %c0_9 = arith.constant 0 : index
    %c0_10 = arith.constant 0 : index
    %19 = vector.load %arg3[%c0_9, %c0_10] : memref<16x1xf32, #tpu.memory_space<vmem>>, vector<16x1xf32>
    %20 = vector.broadcast %19 : vector<16x1xf32> to vector<16x128xf32>
    %21 = vector.broadcast %4 : vector<1x128xf32> to vector<16x128xf32>
    %22 = arith.mulf %20, %21 : vector<16x128xf32>
    %23 = arith.addf %18, %22 : vector<16x128xf32>
    %c0_11 = arith.constant 0 : index
    %c0_12 = arith.constant 0 : index
    %24 = vector.load %arg4[%c0_11, %c0_12] : memref<16x1xf32, #tpu.memory_space<vmem>>, vector<16x1xf32>
    %25 = vector.broadcast %24 : vector<16x1xf32> to vector<16x128xf32>
    %26 = vector.broadcast %16 : vector<1x128xf32> to vector<16x128xf32>
    %27 = arith.mulf %25, %26 : vector<16x128xf32>
    %28 = arith.addf %23, %27 : vector<16x128xf32>
    %c0_13 = arith.constant 0 : index
    %c0_14 = arith.constant 0 : index
    %29 = vector.load %arg5[%c0_13, %c0_14] : memref<16x128xf32, #tpu.memory_space<vmem>>, vector<16x128xf32>
    tpu.vector_store %arg5[%c0_13, %c0_14], %28 {strides = array<i32>} : memref<16x128xf32, #tpu.memory_space<vmem>>, vector<16x128xf32>,
    return
  }
  func.func @transform_0(%arg0: i32) -> (i32, i32) {
    %c0_i32 = arith.constant 0 : i32
    %c0_i32_0 = arith.constant 0 : i32
    return %c0_i32, %arg0 : i32, i32
  }
  func.func @transform_1(%arg0: i32) -> (i32, i32) {
    %c0_i32 = arith.constant 0 : i32
    %c0_i32_0 = arith.constant 0 : i32
    %c0_i32_1 = arith.constant 0 : i32
    return %c0_i32, %c0_i32_0 : i32, i32
  }
  func.func @transform_2(%arg0: i32) -> (i32, i32) {
    %c0_i32 = arith.constant 0 : i32
    %c0_i32_0 = arith.constant 0 : i32
    %c0_i32_1 = arith.constant 0 : i32
    return %c0_i32, %c0_i32_0 : i32, i32
  }
  func.func @transform_3(%arg0: i32) -> (i32, i32) {
    %c0_i32 = arith.constant 0 : i32
    %c0_i32_0 = arith.constant 0 : i32
    %c0_i32_1 = arith.constant 0 : i32
    return %c0_i32, %c0_i32_0 : i32, i32
  }
  func.func @transform_4(%arg0: i32) -> (i32, i32) {
    %c0_i32 = arith.constant 0 : i32
    %c0_i32_0 = arith.constant 0 : i32
    return %c0_i32, %arg0 : i32, i32
  }
}

</mosaic_0001>

<llo_original>
// kernel: dlinear_forward.1
$region0: #{dlinear_forward.1}
  #allocation0 [shape = 'u32[]', space=smem, size = 0x4, offset = 0x4, fixed_abs, tag = 'smem constant byte address 0x4 - core index']
  #allocation1 [shape = 'u32[144,128]{1,0:T(1,128)}', space=vmem, size = 0x12000, scoped, tag = 'internal scratch']
  %s0 = inlined_call_operand.vmem [shape: f32[32,128], index: 0, kind: input, shape index: {}]
  %s1 = inlined_call_operand.vmem [shape: f32[16,32], index: 1, kind: input, shape index: {}]
  %s2 = inlined_call_operand.vmem [shape: f32[16,1], index: 2, kind: input, shape index: {}]
  %s3 = inlined_call_operand.vmem [shape: f32[16,1], index: 3, kind: input, shape index: {}]
  %s4 = inlined_call_operand.vmem [shape: f32[16,128], index: 4, kind: output, shape index: {}]
  %s5 = sld [smem:[#allocation0]]
  $region26: #{dlinear_forward.1} parent=0
    _
  %s7 = ssub.s32 1, %s5
  %s8 = scalar_select 0, %s7, %s5
  // Predicated region
  $region2: #{dlinear_forward.1} parent=0 // pred_check
    _
  $region3: #{dlinear_forward.1} parent=0 // pred_check_branch
    %10 = sbr.rel (0) target = $region5
  $region4: #{dlinear_forward.1} parent=0 // pred_region
    _
  $region5: #{dlinear_forward.1} parent=0 // pred_fallthru
    _
  // Predicated region
  $region6: #{dlinear_forward.1} parent=0 // pred_check
    _
  $region7: #{dlinear_forward.1} parent=0 // pred_check_branch
    %12 = sbr.rel (0) target = $region9
  $region8: #{dlinear_forward.1} parent=0 // pred_region
    _
  $region9: #{dlinear_forward.1} parent=0 // pred_fallthru
    _
  // Predicated region
  $region10: #{dlinear_forward.1} parent=0 // pred_check
    _
  $region11: #{dlinear_forward.1} parent=0 // pred_check_branch
    %14 = sbr.rel (0) target = $region13
  $region12: #{dlinear_forward.1} parent=0 // pred_region
    _
  $region13: #{dlinear_forward.1} parent=0 // pred_fallthru
    _
  // Predicated region
  $region14: #{dlinear_forward.1} parent=0 // pred_check
    _
  $region15: #{dlinear_forward.1} parent=0 // pred_check_branch
    %16 = sbr.rel (0) target = $region17
  $region16: #{dlinear_forward.1} parent=0 // pred_region
    _
  $region17: #{dlinear_forward.1} parent=0 // pred_fallthru
    _
  %v17 = vld [vmem:[%s0] sm:$0xff]
  %v18 = vld [vmem:[%s0 + $0x8] sm:$0xff]
  %v19 = vld [vmem:[%s0 + $0x10] sm:$0xff]
  %v20 = vld [vmem:[%s0 + $0x18] sm:$0xff]
  %v21 = vadd.f32 %v17, %v18
  %v22 = vadd.f32 %v21, %v19
  %v23 = vadd.f32 %v22, %v20
  %v24 = vrot.slane %v23, 4
  %v25 = vadd.f32 %v23, %v24
  %v26 = vrot.slane %v25, 2
  %v27 = vadd.f32 %v25, %v26
  %v28 = vrot.slane %v27, 1
  %v29 = vadd.f32 %v27, %v28
  %v30 = vrcp.pop 32.0
  %v31 = vmul.f32 %v29, %v30
  %v32 = vmul.f32 %v17, %v17
  %v33 = vmul.f32 %v18, %v18
  %v34 = vmul.f32 %v19, %v19
  %v35 = vmul.f32 %v20, %v20
  %v36 = vadd.f32 %v32, %v33
  %v37 = vadd.f32 %v36, %v34
  %v38 = vadd.f32 %v37, %v35
  %v39 = vrot.slane %v38, 4
  %v40 = vadd.f32 %v38, %v39
  %v41 = vrot.slane %v40, 2
  %v42 = vadd.f32 %v40, %v41
  %v43 = vrot.slane %v42, 1
  %v44 = vadd.f32 %v42, %v43
  %v45 = vmul.f32 %v44, %v30
  %v46 = vmul.f32 %v31, %v31
  %v47 = vsub.f32 %v45, %v46
  %v48 = vmax.f32 %v47, 0.0
  %v49 = vadd.f32 %v48, 1e-05
  %v50 = vrsqrt.pop %v49
  %v51 = vmul.f32 %v49, %v50
  %vm52 = vcmp.eq.f32.partialorder %v49, inf
  %v53 = vsel %vm52, %v49, %v51
  %vm54 = vcmp.eq.f32.partialorder %v49, 0.0
  %v55 = vand.u32 %v49, 2147483648
  %v56 = vsel %vm54, %v55, %v53
  %v57 = vld [vmem:[%s1] sm:$0xff]
  %v58 = vld [vmem:[%s1 + $0x8] sm:$0xff]
  %v59 = vld [vmem:[%s2] sm:$0xff]
  %v60 = vld [vmem:[%s2 + $0x8] sm:$0xff]
  %62 = vset.pattern.permute.xlu0 0
  %63 = vperm.xlu0 %62, %v59
  %v64 = vpop.permute.xlu0 %63
  %67 = vset.pattern.permute.xlu0 0
  %68 = vperm.xlu0 %67, %v60
  %v69 = vpop.permute.xlu0 %68
  %v71 = vmul.f32 %v64, %v31
  %v72 = vmul.f32 %v69, %v31
  %vm73 = vcmask 261120
  %v75 = vsel %vm73, %v57, 0
  %v78 = vsel %vm73, %v58, 0
  %80 = vmatprep.subr.mxu0 0.0
  %81 = vmatpush1.msra.mxu0 %v17
  %82 = vmatprep.subr.mxu0 0.0
  %83 = vmatpush1.msra.mxu0 %v18
  %84 = vmatprep.subr.mxu0 0.0
  %85 = vmatpush1.msra.mxu0 %v19
  %86 = vmatprep.subr.mxu0 0.0
  %87 = vmatpush1.msra.mxu0 %v20
  %88 = vmatprep.subr.mxu0 0.0
  %89 = vmatpush1.msra.mxu0 0.0
  %90 = vmatprep.subr.mxu0 0.0
  %91 = vmatpush1.msra.mxu0 0.0
  %92 = vmatprep.subr.mxu0 0.0
  %93 = vmatpush1.msra.mxu0 0.0
  %94 = vmatprep.subr.mxu0 0.0
  %95 = vmatpush1.msra.mxu0 0.0
  %96 = vmatprep.subr.mxu0 0.0
  %97 = vmatpush1.msra.mxu0 0.0
  %98 = vmatprep.subr.mxu0 0.0
  %99 = vmatpush1.msra.mxu0 0.0
  %100 = vmatprep.subr.mxu0 0.0
  %101 = vmatpush1.msra.mxu0 0.0
  %102 = vmatprep.subr.mxu0 0.0
  %103 = vmatpush1.msra.mxu0 0.0
  %104 = vmatprep.subr.mxu0 0.0
  %105 = vmatpush1.msra.mxu0 0.0
  %106 = vmatprep.subr.mxu0 0.0
  %107 = vmatpush1.msra.mxu0 0.0
  %108 = vmatprep.subr.mxu0 0.0
  %109 = vmatpush1.msra.mxu0 0.0
  %110 = vmatprep.subr.mxu0 0.0
  %111 = vmatpush1.msra.mxu0 0.0
  %112 = vmatprep.subr.mxu0 0.0
  %113 = vmatpush1.msra.mxu0 0.0
  %114 = vmatprep.subr.mxu0 0.0
  %115 = vmatpush1.msra.mxu0 0.0
  %116 = vmatprep.subr.mxu0 0.0
  %117 = vmatpush1.msra.mxu0 0.0
  %118 = vmatprep.subr.mxu0 0.0
  %119 = vmatpush1.msra.mxu0 0.0
  %120 = vmatprep.subr.mxu0 0.0
  %121 = vmatpush1.msra.mxu0 0.0
  %122 = vmatprep.subr.mxu0 0.0
  %123 = vmatpush1.msra.mxu0 0.0
  %124 = vmatprep.subr.mxu0 0.0
  %125 = vmatpush1.msra.mxu0 0.0
  %126 = vmatprep.subr.mxu0 0.0
  %127 = vmatpush1.msra.mxu0 0.0
  %128 = vmatprep.subr.mxu0 0.0
  %129 = vmatpush1.msra.mxu0 0.0
  %130 = vmatprep.subr.mxu0 0.0
  %131 = vmatpush1.msra.mxu0 0.0
  %132 = vmatprep.subr.mxu0 0.0
  %133 = vmatpush1.msra.mxu0 0.0
  %134 = vmatprep.subr.mxu0 0.0
  %135 = vmatpush1.msra.mxu0 0.0
  %136 = vmatprep.subr.mxu0 0.0
  %137 = vmatpush1.msra.mxu0 0.0
  %138 = vmatprep.subr.mxu0 0.0
  %139 = vmatpush1.msra.mxu0 0.0
  %140 = vmatprep.subr.mxu0 0.0
  %141 = vmatpush1.msra.mxu0 0.0
  %142 = vmatprep.subr.mxu0 0.0
  %143 = vmatpush1.msra.mxu0 0.0
  %144 = vmatprep.mubr.f32.mxu0 0.0
  %145 = vmatmul.mubr.f32.gmra.mrb[0].mxu0 %v75
  %v146 = vpop.f32.mrb[0].mxu0
  %v147 = vadd.f32 %v71, %v146
  %v148 = vpop.f32.mrb[0].mxu0
  %149 = vmatprep.mubr.f32.mxu0 0.0
  %150 = vmatmul.mubr.f32.gmra.mrb[0].mxu0 %v78
  %v151 = vpop.f32.mrb[0].mxu0
  %v152 = vadd.f32 %v72, %v151
  %v153 = vpop.f32.mrb[0].mxu0
  %154 = vdwg.mxu0
  %v155 = vld [vmem:[%s3] sm:$0xff]
  %v156 = vld [vmem:[%s3 + $0x8] sm:$0xff]
  %158 = vset.pattern.permute.xlu0 0
  %159 = vperm.xlu0 %158, %v155
  %v160 = vpop.permute.xlu0 %159
  %163 = vset.pattern.permute.xlu0 0
  %164 = vperm.xlu0 %163, %v156
  %v165 = vpop.permute.xlu0 %164
  %v167 = vmul.f32 %v160, %v56
  %v168 = vmul.f32 %v165, %v56
  %v169 = vadd.f32 %v147, %v167
  %v170 = vadd.f32 %v152, %v168
  %171 = vst [vmem:[%s4] sm:$0xff] %v169
  %172 = vst [vmem:[%s4 + $0x8] sm:$0xff] %v170
  // Predicated region
  $region18: #{dlinear_forward.1} parent=0 // pred_check
    _
  $region19: #{dlinear_forward.1} parent=0 // pred_check_branch
    %174 = sbr.rel (0) target = $region21
  $region20: #{dlinear_forward.1} parent=0 // pred_region
    _
  $region21: #{dlinear_forward.1} parent=0 // pred_fallthru
    _
  // Predicated region
  $region22: #{dlinear_forward.1} parent=0 // pred_check
    _
  $region23: #{dlinear_forward.1} parent=0 // pred_check_branch
    %176 = sbr.rel (0) target = $region25
  $region24: #{dlinear_forward.1} parent=0 // pred_region
    _
  $region25: #{dlinear_forward.1} parent=0 // pred_fallthru
    _

</llo_original>
